<compile_context>
chip_gen: v7x
topology: tpu7x:2x2x1
jax: 0.10.0
libtpu: 0.0.40
codegen_flags: <defaults>
</compile_context>

<pallas_src>
import functools

import jax
import jax.numpy as jnp
import numpy as np
from jax.experimental import pallas as pl


def mha_kernel(x_ref, bias_ref, w_qkv_ref, b_qkv_ref, blockdiag_ref,
               wo_ref, bo_ref, out_ref, *, number_ix):
    x = x_ref[...]                                    # (B, L, E) f32
    B, L, E = x.shape
    scale = jnp.float32(1.0 / np.sqrt(L))             # scaled by context_len, per the module

    # Single fused QKV projection: one (B*L, E) @ (E, 3E) MXU matmul + one bias add.
    qkv = (jnp.dot(x.reshape(B * L, E), w_qkv_ref[...],
                   preferred_element_type=jnp.float32)
           + b_qkv_ref[...]).reshape(B, L, 3 * E)
    q = qkv[:, number_ix, 0:E]                        # (B, E) query at the static position
    k = qkv[:, :, E:2 * E]                            # (B, L, E)
    v = qkv[:, :, 2 * E:3 * E]                        # (B, L, E)

    # Head-batched scores, no per-head lane slicing:
    #   s[b, l, e] = sum_{e' in head(e)} q[b, e'] * k[b, l, e']
    # VPU sublane-broadcast multiply, then ONE (B*L, E) @ (E, E) block-diagonal matmul.
    # Each head's score is replicated across its D lanes so softmax and the weighted
    # V-sum below run head-batched in the (B, L, E) lane layout.
    kq = k * q[:, None, :]                            # (B, L, E)
    s = jnp.dot(kq.reshape(B * L, E), blockdiag_ref[...],
                preferred_element_type=jnp.float32).reshape(B, L, E)
    s = s * scale + bias_ref[...]                     # additive mask bias (0 / -1e30)

    # Single head-batched softmax over the context axis (one max/exp/sum/reciprocal
    # for all heads at once).
    m = jnp.max(s, axis=1, keepdims=True)             # (B, 1, E)
    p = jnp.exp(s - m)
    den = jnp.sum(p, axis=1, keepdims=True)
    w = p * pl.reciprocal(den, approx=True)           # softmax weights, EUP reciprocal

    # Weighted V-sum directly produces the concatenated (B, E) attention slab (no concat).
    attn = jnp.sum(w * v, axis=1)                     # (B, E)
    out_ref[...] = jnp.dot(attn, wo_ref[...], preferred_element_type=jnp.float32) + bo_ref[...]


def multi_head_attention(x_bel, keep_mask_bool, params, *, n_heads, number_ix=2):
    """x_bel: (B, E, L) float32 — same layout as the PyTorch module input."""
    wq, bq, wk, bk, wv, bv, wo_heads, bo = params
    B, E, L = x_bel.shape
    D = E // n_heads

    # --- glue (outside the kernel, done once) ---
    x_ble = jnp.transpose(x_bel, (0, 2, 1)).astype(jnp.float32)          # NCL -> (B, L, E)
    # Additive mask bias: 0 where kept, -1e30 where masked (same softmax result as -inf
    # for partially masked rows; avoids NaN for fully-masked rows).
    bias = jnp.where(keep_mask_bool, 0.0, -1e30).astype(jnp.float32)[:, :, None]  # (B, L, 1)

    # Fuse per-head Q/K/V weights into ONE (E, 3E) operand, pre-transposed so the kernel
    # computes `x @ W`; columns h*D:(h+1)*D of each E-block belong to head h.
    wq_f = jnp.transpose(wq.reshape(E, E))                               # (E_in, E_out)
    wk_f = jnp.transpose(wk.reshape(E, E))
    wv_f = jnp.transpose(wv.reshape(E, E))
    w_qkv = jnp.concatenate([wq_f, wk_f, wv_f], axis=1)                  # (E, 3E)
    b_qkv = jnp.concatenate([bq.reshape(1, E), bk.reshape(1, E),
                             bv.reshape(1, E)], axis=1)                  # (1, 3E)

    # Block-diagonal head mask: blockdiag[e', e] = 1 iff e' and e belong to the same head.
    head_id = jnp.arange(E) // D
    blockdiag = (head_id[:, None] == head_id[None, :]).astype(jnp.float32)  # (E, E)

    wo_f = jnp.transpose(wo_heads, (0, 2, 1)).reshape(E, E)              # == Wo_full.T
    bo_f = bo.reshape(1, E)

    kernel = functools.partial(mha_kernel, number_ix=number_ix)
    # Single grid step: all operands are tiny and live fully in VMEM; the (B, E) output
    # is written exactly once.
    out = pl.pallas_call(
        kernel,
        out_shape=jax.ShapeDtypeStruct((B, E), jnp.float32),
    )(x_ble, bias, w_qkv, b_qkv, blockdiag, wo_f, bo_f)
    return out


def reference(x_bel, keep_mask_bool, params, *, n_heads, number_ix=2):
    """Pure-JAX reference mirroring the PyTorch module."""
    wq, bq, wk, bk, wv, bv, wo_heads, bo = params
    B, E, L = x_bel.shape
    x = jnp.transpose(x_bel, (0, 2, 1))               # (B, L, E)
    outs = []
    for h in range(n_heads):
        qf = x @ wq[h].T + bq[h, 0]                   # (B, L, D)
        kf = x @ wk[h].T + bk[h, 0]
        vf = x @ wv[h].T + bv[h, 0]
        q = qf[:, number_ix, :]                       # (B, D)
        scores = jnp.einsum('bd,bld->bl', q, kf) / np.sqrt(L)
        scores = jnp.where(keep_mask_bool, scores, -jnp.inf)
        w = jax.nn.softmax(scores, axis=-1)
        outs.append(jnp.einsum('bl,bld->bd', w, vf))
    attn = jnp.concatenate(outs, axis=-1)             # (B, E)
    wo_full = jnp.concatenate([wo_heads[h] for h in range(n_heads)], axis=-1)  # (E, E)
    return attn @ wo_full.T + bo[0]


if __name__ == "__main__":
    B, E, L = 2, 32, 16
    n_heads = 4
    D = E // n_heads
    number_ix = 2

    key = jax.random.PRNGKey(0)
    ks = jax.random.split(key, 9)

    # Parameters with the same shapes as the PyTorch module
    # (nn.Linear(embed_dim, head_dim) per head; nn.Linear(embed_dim, embed_dim) output).
    wq = 0.1 * jax.random.normal(ks[0], (n_heads, D, E), jnp.float32)
    bq = 0.1 * jax.random.normal(ks[1], (n_heads, 1, D), jnp.float32)
    wk = 0.1 * jax.random.normal(ks[2], (n_heads, D, E), jnp.float32)
    bk = 0.1 * jax.random.normal(ks[3], (n_heads, 1, D), jnp.float32)
    wv = 0.1 * jax.random.normal(ks[4], (n_heads, D, E), jnp.float32)
    bv = 0.1 * jax.random.normal(ks[5], (n_heads, 1, D), jnp.float32)
    wo_full = 0.1 * jax.random.normal(ks[6], (E, E), jnp.float32)
    bo = 0.1 * jax.random.normal(ks[7], (1, E), jnp.float32)
    # Wo column blocks per head: wo_heads[h] = Wo[:, h*D:(h+1)*D]
    wo_heads = jnp.stack([wo_full[:, h * D:(h + 1) * D] for h in range(n_heads)], axis=0)

    params = (wq, bq, wk, bk, wv, bv, wo_heads, bo)

    # Input in the PyTorch layout (B, E, L) and a deterministic keep mask (B, L)
    # (never fully masks a row — see the documented semantic difference above).
    x_bel = jax.random.normal(ks[8], (B, E, L), jnp.float32)
    keep_mask_bool = jnp.tile((jnp.arange(L) % 3 != 1)[None, :], (B, 1))

    out = multi_head_attention(x_bel, keep_mask_bool, params,
                               n_heads=n_heads, number_ix=number_ix)
    out = jax.block_until_ready(out)

    ref = reference(x_bel, keep_mask_bool, params, n_heads=n_heads, number_ix=number_ix)
    ref = jax.block_until_ready(ref)

    assert out.shape == (B, E), out.shape
    # Tolerance slightly relaxed because the softmax denominator uses the EUP
    # approximate reciprocal (pl.reciprocal(approx=True)).
    np.testing.assert_allclose(np.asarray(out), np.asarray(ref), rtol=5e-3, atol=5e-3)
    print("KERNEL_OK")
</pallas_src>

<mosaic_0001>
module attributes {stable_mosaic.version = 11 : i64} {
  func.func @mha_kernel(%arg0: memref<2x16x32xf32, #tpu.memory_space<vmem>>, %arg1: memref<2x16x1xf32, #tpu.memory_space<vmem>>, %arg2: memref<32x96xf32, #tpu.memory_space<vmem>>, %arg3: memref<1x96xf32, #tpu.memory_space<vmem>>, %arg4: memref<32x32xf32, #tpu.memory_space<vmem>>, %arg5: memref<32x32xf32, #tpu.memory_space<vmem>>, %arg6: memref<1x32xf32, #tpu.memory_space<vmem>>, %arg7: memref<2x32xf32, #tpu.memory_space<vmem>>) attributes {dimension_semantics = [], scalar_prefetch = 0 : i64, scratch_operands = 0 : i64, tpu.core_type = #tpu.core_type<tc>} {
    %c0 = arith.constant 0 : index
    %c0_0 = arith.constant 0 : index
    %c0_1 = arith.constant 0 : index
    %0 = vector.load %arg0[%c0, %c0_0, %c0_1] : memref<2x16x32xf32, #tpu.memory_space<vmem>>, vector<2x16x32xf32>
    %1 = vector.shape_cast %0 : vector<2x16x32xf32> to vector<32x32xf32>
    %c0_2 = arith.constant 0 : index
    %c0_3 = arith.constant 0 : index
    %2 = vector.load %arg2[%c0_2, %c0_3] : memref<32x96xf32, #tpu.memory_space<vmem>>, vector<32x96xf32>
    %cst = arith.constant dense<0.000000e+00> : vector<32x96xf32>
    %3 = tpu.matmul %1, %2, %cst {dimension_numbers = #tpu.dot_dimension_numbers<[1], [0], [0], [1], [0, 0, 1, 1], [], []>} : vector<32x32xf32>, vector<32x96xf32>, vector<32x96xf32> -> vector<32x96xf32>
    %c0_4 = arith.constant 0 : index
    %c0_5 = arith.constant 0 : index
    %4 = vector.load %arg3[%c0_4, %c0_5] : memref<1x96xf32, #tpu.memory_space<vmem>>, vector<1x96xf32>
    %5 = vector.broadcast %4 : vector<1x96xf32> to vector<32x96xf32>
    %6 = arith.addf %3, %5 : vector<32x96xf32>
    %7 = vector.shape_cast %6 : vector<32x96xf32> to vector<2x16x96xf32>
    %8 = vector.extract_strided_slice %7 {offsets = [0, 2, 0], sizes = [2, 1, 32], strides = [1, 1, 1]} : vector<2x16x96xf32> to vector<2x1x32xf32>
    %9 = vector.shape_cast %8 : vector<2x1x32xf32> to vector<2x32xf32>
    %10 = vector.extract_strided_slice %7 {offsets = [0, 0, 32], sizes = [2, 16, 32], strides = [1, 1, 1]} : vector<2x16x96xf32> to vector<2x16x32xf32>
    %11 = vector.extract_strided_slice %7 {offsets = [0, 0, 64], sizes = [2, 16, 32], strides = [1, 1, 1]} : vector<2x16x96xf32> to vector<2x16x32xf32>
    %12 = vector.shape_cast %9 : vector<2x32xf32> to vector<2x1x32xf32>
    %13 = vector.broadcast %12 : vector<2x1x32xf32> to vector<2x16x32xf32>
    %14 = arith.mulf %10, %13 : vector<2x16x32xf32>
    %15 = vector.shape_cast %14 : vector<2x16x32xf32> to vector<32x32xf32>
    %c0_6 = arith.constant 0 : index
    %c0_7 = arith.constant 0 : index
    %16 = vector.load %arg4[%c0_6, %c0_7] : memref<32x32xf32, #tpu.memory_space<vmem>>, vector<32x32xf32>
    %cst_8 = arith.constant dense<0.000000e+00> : vector<32x32xf32>
    %17 = tpu.matmul %15, %16, %cst_8 {dimension_numbers = #tpu.dot_dimension_numbers<[1], [0], [0], [1], [0, 0, 1, 1], [], []>} : vector<32x32xf32>, vector<32x32xf32>, vector<32x32xf32> -> vector<32x32xf32>
    %18 = vector.shape_cast %17 : vector<32x32xf32> to vector<2x16x32xf32>
    %cst_9 = arith.constant 2.500000e-01 : f32
    %19 = vector.broadcast %cst_9 : f32 to vector<2x16x32xf32>
    %20 = arith.mulf %18, %19 : vector<2x16x32xf32>
    %c0_10 = arith.constant 0 : index
    %c0_11 = arith.constant 0 : index
    %c0_12 = arith.constant 0 : index
    %21 = vector.load %arg1[%c0_10, %c0_11, %c0_12] : memref<2x16x1xf32, #tpu.memory_space<vmem>>, vector<2x16x1xf32>
    %22 = vector.broadcast %21 : vector<2x16x1xf32> to vector<2x16x32xf32>
    %23 = arith.addf %20, %22 : vector<2x16x32xf32>
    %cst_13 = arith.constant dense<0xFF800000> : vector<2x32xf32>
    %24 = vector.multi_reduction <maximumf>, %23, %cst_13 [1] : vector<2x16x32xf32> to vector<2x32xf32>
    %25 = vector.shape_cast %24 : vector<2x32xf32> to vector<2x1x32xf32>
    %26 = vector.broadcast %25 : vector<2x1x32xf32> to vector<2x16x32xf32>
    %27 = arith.subf %23, %26 : vector<2x16x32xf32>
    %28 = math.exp %27 : vector<2x16x32xf32>
    %cst_14 = arith.constant dense<0.000000e+00> : vector<2x32xf32>
    %29 = vector.multi_reduction <add>, %28, %cst_14 [1] : vector<2x16x32xf32> to vector<2x32xf32>
    %30 = vector.shape_cast %29 : vector<2x32xf32> to vector<2x1x32xf32>
    %31 = tpu.reciprocal %30 {approx = true} : vector<2x1x32xf32> -> vector<2x1x32xf32>
    %32 = vector.broadcast %31 : vector<2x1x32xf32> to vector<2x16x32xf32>
    %33 = arith.mulf %28, %32 : vector<2x16x32xf32>
    %34 = arith.mulf %33, %11 : vector<2x16x32xf32>
    %cst_15 = arith.constant dense<0.000000e+00> : vector<2x32xf32>
    %35 = vector.multi_reduction <add>, %34, %cst_15 [1] : vector<2x16x32xf32> to vector<2x32xf32>
    %c0_16 = arith.constant 0 : index
    %c0_17 = arith.constant 0 : index
    %36 = vector.load %arg5[%c0_16, %c0_17] : memref<32x32xf32, #tpu.memory_space<vmem>>, vector<32x32xf32>
    %cst_18 = arith.constant dense<0.000000e+00> : vector<2x32xf32>
    %37 = tpu.matmul %35, %36, %cst_18 {dimension_numbers = #tpu.dot_dimension_numbers<[1], [0], [0], [1], [0, 0, 1, 1], [], []>} : vector<2x32xf32>, vector<32x32xf32>, vector<2x32xf32> -> vector<2x32xf32>
    %c0_19 = arith.constant 0 : index
    %c0_20 = arith.constant 0 : index
    %38 = vector.load %arg6[%c0_19, %c0_20] : memref<1x32xf32, #tpu.memory_space<vmem>>, vector<1x32xf32>
    %39 = vector.broadcast %38 : vector<1x32xf32> to vector<2x32xf32>
    %40 = arith.addf %37, %39 : vector<2x32xf32>
    %c0_21 = arith.constant 0 : index
    %c0_22 = arith.constant 0 : index
    %41 = vector.load %arg7[%c0_21, %c0_22] : memref<2x32xf32, #tpu.memory_space<vmem>>, vector<2x32xf32>
    tpu.vector_store %arg7[%c0_21, %c0_22], %40 {strides = array<i32>} : memref<2x32xf32, #tpu.memory_space<vmem>>, vector<2x32xf32>,
    return
  }
}

</mosaic_0001>

<llo_original>
// kernel: tpu_custom_call.1
$region0: #{tpu_custom_call.1}
  #allocation0 [shape = 'u32[]', space=smem, size = 0x4, offset = 0x4, fixed_abs, tag = 'smem constant byte address 0x4 - core index']
  #allocation1 [shape = 'u32[144,128]{1,0:T(1,128)}', space=vmem, size = 0x12000, scoped, tag = 'internal scratch']
  %s0 = inlined_call_operand.vmem [shape: f32[2,16,32], index: 0, kind: input, shape index: {}]
  %s1 = inlined_call_operand.vmem [shape: f32[2,16,1], index: 1, kind: input, shape index: {}]
  %s2 = inlined_call_operand.hbm [shape: f32[32,96], index: 2, kind: input, shape index: {}]
  %s3 = inlined_call_operand.vmem [shape: f32[1,96], index: 3, kind: input, shape index: {}]
  %s4 = inlined_call_operand.hbm [shape: f32[32,32], index: 4, kind: input, shape index: {}]
  %s5 = inlined_call_operand.hbm [shape: f32[32,32], index: 5, kind: input, shape index: {}]
  %s6 = inlined_call_operand.vmem [shape: f32[1,32], index: 6, kind: input, shape index: {}]
  %s7 = inlined_call_operand.hbm [shape: f32[2,32], index: 7, kind: output, shape index: {}]
  %s8 = sld [smem:[#allocation0]]
  $region50: #{tpu_custom_call.1} parent=0
    _
  %s10 = ssub.s32 1, %s8
  %s11 = scalar_select 0, %s10, %s8
  $region1: #{tpu_custom_call.1} parent=0
    #allocation2 [shape = 'u8[16384]{0}', space=vmem, size = 0x4000, scoped, tag = 'input window, operand 2, single buffered']
    #allocation3 [shape = 's32[1]{0}', space=sflag, size = 0x4, scoped, tag = 'scoped memory for tpu_custom_call.1']
    #allocation4 [shape = 's32[1]{0}', space=sflag, size = 0x4, scoped, tag = 'scoped memory for tpu_custom_call.1']
    #allocation5 [shape = 'u8[16384]{0}', space=vmem, size = 0x4000, scoped, tag = 'input window, operand 4, single buffered']
    #allocation6 [shape = 's32[1]{0}', space=sflag, size = 0x4, scoped, tag = 'scoped memory for tpu_custom_call.1']
    #allocation7 [shape = 'u8[16384]{0}', space=vmem, size = 0x4000, scoped, tag = 'input window, operand 5, single buffered']
    #allocation8 [shape = 'u8[1024]{0}', space=vmem, size = 0x400, scoped, tag = 'output window, operand 0, single buffered']
    %12 = vsyncpa [#allocation3], 0
    %13 = vsyncpa [#allocation6], 0
    %14 = vsyncpa [#allocation4], 0
    // Predicated region
    $region2: #{tpu_custom_call.1} parent=1 // pred_check
      _
    $region3: #{tpu_custom_call.1} parent=1 // pred_check_branch
      %16 = sbr.rel (0) target = $region5
    $region4: #{tpu_custom_call.1} parent=1 // pred_region
      _
    $region5: #{tpu_custom_call.1} parent=1 // pred_fallthru
      _
    // Predicated region
    $region6: #{tpu_custom_call.1} parent=1 // pred_check
      _
    $region7: #{tpu_custom_call.1} parent=1 // pred_check_branch
      %18 = sbr.rel (0) target = $region9
    $region8: #{tpu_custom_call.1} parent=1 // pred_region
      _
    $region9: #{tpu_custom_call.1} parent=1 // pred_fallthru
      _
    // Predicated region
    $region10: #{tpu_custom_call.1} parent=1 // pred_check
      _
    $region11: #{tpu_custom_call.1} parent=1 // pred_check_branch
      %20 = sbr.rel (0) target = $region13
    $region12: #{tpu_custom_call.1} parent=1 // pred_region
      %s22 = ssub.s32 512, 512
      %23 = vsyncadd [#allocation3], %s22
      %s24 = sshll.u32 [#allocation2], 4
      %s25 = int_to_ptr.vmem [resolvable:$true] %s24
      %30 = dma.hbm_to_vmem [thread:$0]  %s2, 512, %s25, [#allocation3], 128, 128, 8
    $region13: #{tpu_custom_call.1} parent=1 // pred_fallthru
      _
    // Predicated region
    $region14: #{tpu_custom_call.1} parent=1 // pred_check
      _
    $region15: #{tpu_custom_call.1} parent=1 // pred_check_branch
      %32 = sbr.rel (0) target = $region17
    $region16: #{tpu_custom_call.1} parent=1 // pred_region
      _
    $region17: #{tpu_custom_call.1} parent=1 // pred_fallthru
      _
    // Predicated region
    $region18: #{tpu_custom_call.1} parent=1 // pred_check
      _
    $region19: #{tpu_custom_call.1} parent=1 // pred_check_branch
      %34 = sbr.rel (0) target = $region21
    $region20: #{tpu_custom_call.1} parent=1 // pred_region
      %s36 = ssub.s32 512, 512
      %37 = vsyncadd [#allocation6], %s36
      %s38 = sshll.u32 [#allocation5], 4
      %s39 = int_to_ptr.vmem [resolvable:$true] %s38
      %44 = dma.hbm_to_vmem [thread:$0]  %s4, 512, %s39, [#allocation6], 128, 128, 8
    $region21: #{tpu_custom_call.1} parent=1 // pred_fallthru
      _
    // Predicated region
    $region22: #{tpu_custom_call.1} parent=1 // pred_check
      _
    $region23: #{tpu_custom_call.1} parent=1 // pred_check_branch
      %46 = sbr.rel (0) target = $region25
    $region24: #{tpu_custom_call.1} parent=1 // pred_region
      %s48 = ssub.s32 512, 512
      %49 = vsyncadd [#allocation6], %s48
      %s50 = sshll.u32 [#allocation7], 4
      %s51 = int_to_ptr.vmem [resolvable:$true] %s50
      %56 = dma.hbm_to_vmem [thread:$0]  %s5, 512, %s51, [#allocation6], 128, 128, 8
    $region25: #{tpu_custom_call.1} parent=1 // pred_fallthru
      _
    // Predicated region
    $region26: #{tpu_custom_call.1} parent=1 // pred_check
      _
    $region27: #{tpu_custom_call.1} parent=1 // pred_check_branch
      %58 = sbr.rel (0) target = $region29
    $region28: #{tpu_custom_call.1} parent=1 // pred_region
      _
    $region29: #{tpu_custom_call.1} parent=1 // pred_fallthru
      _
    // Predicated region
    $region30: #{tpu_custom_call.1} parent=1 // pred_check
      _
    $region31: #{tpu_custom_call.1} parent=1 // pred_check_branch
      %60 = sbr.rel (0) target = $region33
    $region32: #{tpu_custom_call.1} parent=1 // pred_region
      %61 = dma.done [#allocation3], 512
    $region33: #{tpu_custom_call.1} parent=1 // pred_fallthru
      _
    // Predicated region
    $region34: #{tpu_custom_call.1} parent=1 // pred_check
      _
    $region35: #{tpu_custom_call.1} parent=1 // pred_check_branch
      %63 = sbr.rel (0) target = $region37
    $region36: #{tpu_custom_call.1} parent=1 // pred_region
      %64 = dma.done [#allocation6], 512
    $region37: #{tpu_custom_call.1} parent=1 // pred_fallthru
      _
    // Predicated region
    $region38: #{tpu_custom_call.1} parent=1 // pred_check
      _
    $region39: #{tpu_custom_call.1} parent=1 // pred_check_branch
      %66 = sbr.rel (0) target = $region41
    $region40: #{tpu_custom_call.1} parent=1 // pred_region
      %67 = dma.done [#allocation6], 512
    $region41: #{tpu_custom_call.1} parent=1 // pred_fallthru
      _
    %v68 = vld [vmem:[%s0] sm:$0xff]
    %v69 = vld [vmem:[%s0 + $0x8] sm:$0xff]
    %v70 = vld [vmem:[%s0 + $0x10] sm:$0xff]
    %v71 = vld [vmem:[%s0 + $0x18] sm:$0xff]
    %v72 = vld [vmem:[#allocation2] sm:$0xff]
    %v73 = vld [vmem:[#allocation2 + $0x8] sm:$0xff]
    %v74 = vld [vmem:[#allocation2 + $0x10] sm:$0xff]
    %v75 = vld [vmem:[#allocation2 + $0x18] sm:$0xff]
    %v76 = vld [vmem:[%s3] sm:$0x1]
    %v78 = vlaneseq
    %v79 = vshrl.u32 %v78, 7
    %v80 = vsub.s32 0, %v79
    %v81 = vrot.slane %v76, %v80
    %vm83 = vcmask 261120
    %v85 = vsel %vm83, %v68, 0
    %v88 = vsel %vm83, %v69, 0
    %v91 = vsel %vm83, %v70, 0
    %v94 = vsel %vm83, %v71, 0
    %96 = vmatprep.subr.mxu0 0.0
    %97 = vmatpush1.msra.mxu0 %v72
    %98 = vmatprep.subr.mxu0 0.0
    %99 = vmatpush1.msra.mxu0 %v73
    %100 = vmatprep.subr.mxu0 0.0
    %101 = vmatpush1.msra.mxu0 %v74
    %102 = vmatprep.subr.mxu0 0.0
    %103 = vmatpush1.msra.mxu0 %v75
    %104 = vmatprep.subr.mxu0 0.0
    %105 = vmatpush1.msra.mxu0 0.0
    %106 = vmatprep.subr.mxu0 0.0
    %107 = vmatpush1.msra.mxu0 0.0
    %108 = vmatprep.subr.mxu0 0.0
    %109 = vmatpush1.msra.mxu0 0.0
    %110 = vmatprep.subr.mxu0 0.0
    %111 = vmatpush1.msra.mxu0 0.0
    %112 = vmatprep.subr.mxu0 0.0
    %113 = vmatpush1.msra.mxu0 0.0
    %114 = vmatprep.subr.mxu0 0.0
    %115 = vmatpush1.msra.mxu0 0.0
    %116 = vmatprep.subr.mxu0 0.0
    %117 = vmatpush1.msra.mxu0 0.0
    %118 = vmatprep.subr.mxu0 0.0
    %119 = vmatpush1.msra.mxu0 0.0
    %120 = vmatprep.subr.mxu0 0.0
    %121 = vmatpush1.msra.mxu0 0.0
    %122 = vmatprep.subr.mxu0 0.0
    %123 = vmatpush1.msra.mxu0 0.0
    %124 = vmatprep.subr.mxu0 0.0
    %125 = vmatpush1.msra.mxu0 0.0
    %126 = vmatprep.subr.mxu0 0.0
    %127 = vmatpush1.msra.mxu0 0.0
    %128 = vmatprep.subr.mxu0 0.0
    %129 = vmatpush1.msra.mxu0 0.0
    %130 = vmatprep.subr.mxu0 0.0
    %131 = vmatpush1.msra.mxu0 0.0
    %132 = vmatprep.subr.mxu0 0.0
    %133 = vmatpush1.msra.mxu0 0.0
    %134 = vmatprep.subr.mxu0 0.0
    %135 = vmatpush1.msra.mxu0 0.0
    %136 = vmatprep.subr.mxu0 0.0
    %137 = vmatpush1.msra.mxu0 0.0
    %138 = vmatprep.subr.mxu0 0.0
    %139 = vmatpush1.msra.mxu0 0.0
    %140 = vmatprep.subr.mxu0 0.0
    %141 = vmatpush1.msra.mxu0 0.0
    %142 = vmatprep.subr.mxu0 0.0
    %143 = vmatpush1.msra.mxu0 0.0
    %144 = vmatprep.subr.mxu0 0.0
    %145 = vmatpush1.msra.mxu0 0.0
    %146 = vmatprep.subr.mxu0 0.0
    %147 = vmatpush1.msra.mxu0 0.0
    %148 = vmatprep.subr.mxu0 0.0
    %149 = vmatpush1.msra.mxu0 0.0
    %150 = vmatprep.subr.mxu0 0.0
    %151 = vmatpush1.msra.mxu0 0.0
    %152 = vmatprep.subr.mxu0 0.0
    %153 = vmatpush1.msra.mxu0 0.0
    %154 = vmatprep.subr.mxu0 0.0
    %155 = vmatpush1.msra.mxu0 0.0
    %156 = vmatprep.subr.mxu0 0.0
    %157 = vmatpush1.msra.mxu0 0.0
    %158 = vmatprep.subr.mxu0 0.0
    %159 = vmatpush1.msra.mxu0 0.0
    %160 = vmatprep.mubr.f32.mxu0 0.0
    %161 = vmatmul.mubr.f32.gmra.mrb[0].mxu0 %v85
    %v162 = vpop.f32.mrb[0].mxu0
    %v163 = vadd.f32 %v81, %v162
    %v164 = vpop.f32.mrb[0].mxu0
    %165 = vmatprep.mubr.f32.mxu0 0.0
    %166 = vmatmul.mubr.f32.gmra.mrb[0].mxu0 %v88
    %v167 = vpop.f32.mrb[0].mxu0
    %v168 = vadd.f32 %v81, %v167
    %v169 = vpop.f32.mrb[0].mxu0
    %170 = vmatprep.mubr.f32.mxu0 0.0
    %171 = vmatmul.mubr.f32.gmra.mrb[0].mxu0 %v91
    %v172 = vpop.f32.mrb[0].mxu0
    %v173 = vadd.f32 %v81, %v172
    %v174 = vpop.f32.mrb[0].mxu0
    %175 = vmatprep.mubr.f32.mxu0 0.0
    %176 = vmatmul.mubr.f32.gmra.mrb[0].mxu0 %v94
    %v177 = vpop.f32.mrb[0].mxu0
    %v178 = vadd.f32 %v81, %v177
    %v179 = vpop.f32.mrb[0].mxu0
    %180 = vdwg.mxu0
    %v181 = vlaneseq
    %v182 = vshrl.u32 %v181, 7
    %v183 = vsub.s32 2, %v182
    %v184 = vrot.slane %v163, %v183
    %v185 = vlaneseq
    %v186 = vshrl.u32 %v185, 7
    %v187 = vsub.s32 2, %v186
    %v188 = vrot.slane %v173, %v187
    %191 = vrot.lane.b32.xlu0 %v184, 32
    %v192 = vpop.permute.xlu0 %191
    %193 = vrot.lane.b32.xlu0 %v188, 32
    %v194 = vpop.permute.xlu0 %193
    %v197 = vmul.f32 %v163, %v192
    %v198 = vmul.f32 %v168, %v192
    %v199 = vmul.f32 %v173, %v194
    %v200 = vmul.f32 %v178, %v194
    %v201 = vld [vmem:[#allocation5] sm:$0xff]
    %v202 = vld [vmem:[#allocation5 + $0x8] sm:$0xff]
    %v203 = vld [vmem:[#allocation5 + $0x10] sm:$0xff]
    %v204 = vld [vmem:[#allocation5 + $0x18] sm:$0xff]
    %209 = vrot.lane.b32.xlu0 %v197, 96
    %v210 = vpop.permute.xlu0 %209
    %211 = vrot.lane.b32.xlu0 %v198, 96
    %v212 = vpop.permute.xlu0 %211
    %213 = vrot.lane.b32.xlu0 %v199, 96
    %v214 = vpop.permute.xlu0 %213
    %215 = vrot.lane.b32.xlu0 %v200, 96
    %v216 = vpop.permute.xlu0 %215
    %v217 = vsel %vm83, %v210, 0
    %v219 = vsel %vm83, %v212, 0
    %v221 = vsel %vm83, %v214, 0
    %v223 = vsel %vm83, %v216, 0
    %225 = vmatprep.subr.mxu0 0.0
    %226 = vmatpush1.msra.mxu0 %v201
    %227 = vmatprep.subr.mxu0 0.0
    %228 = vmatpush1.msra.mxu0 %v202
    %229 = vmatprep.subr.mxu0 0.0
    %230 = vmatpush1.msra.mxu0 %v203
    %231 = vmatprep.subr.mxu0 0.0
    %232 = vmatpush1.msra.mxu0 %v204
    %233 = vmatprep.subr.mxu0 0.0
    %234 = vmatpush1.msra.mxu0 0.0
    %235 = vmatprep.subr.mxu0 0.0
    %236 = vmatpush1.msra.mxu0 0.0
    %237 = vmatprep.subr.mxu0 0.0
    %238 = vmatpush1.msra.mxu0 0.0
    %239 = vmatprep.subr.mxu0 0.0
    %240 = vmatpush1.msra.mxu0 0.0
    %241 = vmatprep.subr.mxu0 0.0
    %242 = vmatpush1.msra.mxu0 0.0
    %243 = vmatprep.subr.mxu0 0.0
    %244 = vmatpush1.msra.mxu0 0.0
    %245 = vmatprep.subr.mxu0 0.0
    %246 = vmatpush1.msra.mxu0 0.0
    %247 = vmatprep.subr.mxu0 0.0
    %248 = vmatpush1.msra.mxu0 0.0
    %249 = vmatprep.subr.mxu0 0.0
    %250 = vmatpush1.msra.mxu0 0.0
    %251 = vmatprep.subr.mxu0 0.0
    %252 = vmatpush1.msra.mxu0 0.0
    %253 = vmatprep.subr.mxu0 0.0
    %254 = vmatpush1.msra.mxu0 0.0
    %255 = vmatprep.subr.mxu0 0.0
    %256 = vmatpush1.msra.mxu0 0.0
    %257 = vmatprep.subr.mxu0 0.0
    %258 = vmatpush1.msra.mxu0 0.0
    %259 = vmatprep.subr.mxu0 0.0
    %260 = vmatpush1.msra.mxu0 0.0
    %261 = vmatprep.subr.mxu0 0.0
    %262 = vmatpush1.msra.mxu0 0.0
    %263 = vmatprep.subr.mxu0 0.0
    %264 = vmatpush1.msra.mxu0 0.0
    %265 = vmatprep.subr.mxu0 0.0
    %266 = vmatpush1.msra.mxu0 0.0
    %267 = vmatprep.subr.mxu0 0.0
    %268 = vmatpush1.msra.mxu0 0.0
    %269 = vmatprep.subr.mxu0 0.0
    %270 = vmatpush1.msra.mxu0 0.0
    %271 = vmatprep.subr.mxu0 0.0
    %272 = vmatpush1.msra.mxu0 0.0
    %273 = vmatprep.subr.mxu0 0.0
    %274 = vmatpush1.msra.mxu0 0.0
    %275 = vmatprep.subr.mxu0 0.0
    %276 = vmatpush1.msra.mxu0 0.0
    %277 = vmatprep.subr.mxu0 0.0
    %278 = vmatpush1.msra.mxu0 0.0
    %279 = vmatprep.subr.mxu0 0.0
    %280 = vmatpush1.msra.mxu0 0.0
    %281 = vmatprep.subr.mxu0 0.0
    %282 = vmatpush1.msra.mxu0 0.0
    %283 = vmatprep.subr.mxu0 0.0
    %284 = vmatpush1.msra.mxu0 0.0
    %285 = vmatprep.subr.mxu0 0.0
    %286 = vmatpush1.msra.mxu0 0.0
    %287 = vmatprep.subr.mxu0 0.0
    %288 = vmatpush1.msra.mxu0 0.0
    %289 = vmatprep.mubr.f32.mxu0 0.0
    %290 = vmatmul.mubr.f32.gmra.mrb[0].mxu0 %v217
    %v291 = vpop.f32.mrb[0].mxu0
    %v292 = vadd.f32 0.0, %v291
    %v293 = vpop.f32.mrb[0].mxu0
    %294 = vmatprep.mubr.f32.mxu0 0.0
    %295 = vmatmul.mubr.f32.gmra.mrb[0].mxu0 %v219
    %v296 = vpop.f32.mrb[0].mxu0
    %v297 = vadd.f32 0.0, %v296
    %v298 = vpop.f32.mrb[0].mxu0
    %299 = vmatprep.mubr.f32.mxu0 0.0
    %300 = vmatmul.mubr.f32.gmra.mrb[0].mxu0 %v221
    %v301 = vpop.f32.mrb[0].mxu0
    %v302 = vadd.f32 0.0, %v301
    %v303 = vpop.f32.mrb[0].mxu0
    %304 = vmatprep.mubr.f32.mxu0 0.0
    %305 = vmatmul.mubr.f32.gmra.mrb[0].mxu0 %v223
    %v306 = vpop.f32.mrb[0].mxu0
    %v307 = vadd.f32 0.0, %v306
    %v308 = vpop.f32.mrb[0].mxu0
    %309 = vdwg.mxu0
    %v310 = vmul.f32 %v292, 0.25
    %v311 = vmul.f32 %v297, 0.25
    %v312 = vmul.f32 %v302, 0.25
    %v313 = vmul.f32 %v307, 0.25
    %v314 = vld [vmem:[%s1] sm:$0xff]
    %v315 = vld [vmem:[%s1 + $0x8] sm:$0xff]
    %v316 = vld [vmem:[%s1 + $0x10] sm:$0xff]
    %v317 = vld [vmem:[%s1 + $0x18] sm:$0xff]
    %319 = vset.pattern.permute.xlu0 0
    %320 = vperm.xlu0 %319, %v314
    %v321 = vpop.permute.xlu0 %320
    %324 = vset.pattern.permute.xlu0 0
    %325 = vperm.xlu0 %324, %v315
    %v326 = vpop.permute.xlu0 %325
    %329 = vset.pattern.permute.xlu0 0
    %330 = vperm.xlu0 %329, %v316
    %v331 = vpop.permute.xlu0 %330
    %334 = vset.pattern.permute.xlu0 0
    %335 = vperm.xlu0 %334, %v317
    %v336 = vpop.permute.xlu0 %335
    %v338 = vadd.f32 %v310, %v321
    %v339 = vadd.f32 %v311, %v326
    %v340 = vadd.f32 %v312, %v331
    %v341 = vadd.f32 %v313, %v336
    %v342 = vsel %vm83, %v338, -inf
    %v343 = vsel %vm83, %v339, -inf
    %v344 = vmax.f32 %v342, %v343
    %v345 = vrot.slane %v344, 4
    %v346 = vmax.f32 %v344, %v345
    %v347 = vrot.slane %v346, 2
    %v348 = vmax.f32 %v346, %v347
    %v349 = vrot.slane %v348, 1
    %v350 = vmax.f32 %v348, %v349
    %v351 = vsel %vm83, %v340, -inf
    %v352 = vsel %vm83, %v341, -inf
    %v353 = vmax.f32 %v351, %v352
    %v354 = vrot.slane %v353, 4
    %v355 = vmax.f32 %v353, %v354
    %v356 = vrot.slane %v355, 2
    %v357 = vmax.f32 %v355, %v356
    %v358 = vrot.slane %v357, 1
    %v359 = vmax.f32 %v357, %v358
    %v360 = vsub.f32 %v338, %v350
    %v361 = vsub.f32 %v339, %v350
    %v362 = vsub.f32 %v340, %v359
    %v363 = vsub.f32 %v341, %v359
    %v364 = vmul.f32 %v360, 1.442695
    %v365 = vpow.pop %v364
    %v366 = vmul.f32 %v361, 1.442695
    %v367 = vpow.pop %v366
    %v368 = vmul.f32 %v362, 1.442695
    %v369 = vpow.pop %v368
    %v370 = vmul.f32 %v363, 1.442695
    %v371 = vpow.pop %v370
    %v372 = vsel %vm83, %v365, 0.0
    %v373 = vsel %vm83, %v367, 0.0
    %v374 = vadd.f32 %v372, %v373
    %v375 = vrot.slane %v374, 4
    %v376 = vadd.f32 %v374, %v375
    %v377 = vrot.slane %v376, 2
    %v378 = vadd.f32 %v376, %v377
    %v379 = vrot.slane %v378, 1
    %v380 = vadd.f32 %v378, %v379
    %v381 = vsel %vm83, %v369, 0.0
    %v382 = vsel %vm83, %v371, 0.0
    %v383 = vadd.f32 %v381, %v382
    %v384 = vrot.slane %v383, 4
    %v385 = vadd.f32 %v383, %v384
    %v386 = vrot.slane %v385, 2
    %v387 = vadd.f32 %v385, %v386
    %v388 = vrot.slane %v387, 1
    %v389 = vadd.f32 %v387, %v388
    %v390 = vrcp.pop %v380
    %v391 = vrcp.pop %v389
    %v392 = vmul.f32 %v365, %v390
    %v393 = vmul.f32 %v367, %v390
    %v394 = vmul.f32 %v369, %v391
    %v395 = vmul.f32 %v371, %v391
    %400 = vrot.lane.b32.xlu0 %v163, 64
    %v401 = vpop.permute.xlu0 %400
    %402 = vrot.lane.b32.xlu0 %v168, 64
    %v403 = vpop.permute.xlu0 %402
    %404 = vrot.lane.b32.xlu0 %v173, 64
    %v405 = vpop.permute.xlu0 %404
    %406 = vrot.lane.b32.xlu0 %v178, 64
    %v407 = vpop.permute.xlu0 %406
    %v412 = vmul.f32 %v392, %v401
    %v413 = vmul.f32 %v393, %v403
    %v414 = vmul.f32 %v394, %v405
    %v415 = vmul.f32 %v395, %v407
    %v416 = vsel %vm83, %v412, 0.0
    %v417 = vsel %vm83, %v413, 0.0
    %v418 = vadd.f32 %v416, %v417
    %v419 = vrot.slane %v418, 4
    %v420 = vadd.f32 %v418, %v419
    %v421 = vrot.slane %v420, 2
    %v422 = vadd.f32 %v420, %v421
    %v423 = vrot.slane %v422, 1
    %v424 = vadd.f32 %v422, %v423
    %v425 = vsel %vm83, %v414, 0.0
    %v426 = vsel %vm83, %v415, 0.0
    %v427 = vadd.f32 %v425, %v426
    %v428 = vrot.slane %v427, 4
    %v429 = vadd.f32 %v427, %v428
    %v430 = vrot.slane %v429, 2
    %v431 = vadd.f32 %v429, %v430
    %v432 = vrot.slane %v431, 1
    %v433 = vadd.f32 %v431, %v432
    %v434 = vld [vmem:[#allocation7] sm:$0xff]
    %v435 = vld [vmem:[#allocation7 + $0x8] sm:$0xff]
    %v436 = vld [vmem:[#allocation7 + $0x10] sm:$0xff]
    %v437 = vld [vmem:[#allocation7 + $0x18] sm:$0xff]
    %v438 = vld [vmem:[%s6] sm:$0x1]
    %v440 = vlaneseq
    %v441 = vshrl.u32 %v440, 7
    %v442 = vsub.s32 0, %v441
    %v443 = vrot.slane %v438, %v442
    %vm447 = vcmask 1041409
    %v448 = vsel %vm447, %v433, %v424
    %v449 = vsel %vm83, %v448, 0
    %451 = vmatprep.subr.mxu0 0.0
    %452 = vmatpush1.msra.mxu0 %v434
    %453 = vmatprep.subr.mxu0 0.0
    %454 = vmatpush1.msra.mxu0 %v435
    %455 = vmatprep.subr.mxu0 0.0
    %456 = vmatpush1.msra.mxu0 %v436
    %457 = vmatprep.subr.mxu0 0.0
    %458 = vmatpush1.msra.mxu0 %v437
    %459 = vmatprep.subr.mxu0 0.0
    %460 = vmatpush1.msra.mxu0 0.0
    %461 = vmatprep.subr.mxu0 0.0
    %462 = vmatpush1.msra.mxu0 0.0
    %463 = vmatprep.subr.mxu0 0.0
    %464 = vmatpush1.msra.mxu0 0.0
    %465 = vmatprep.subr.mxu0 0.0
    %466 = vmatpush1.msra.mxu0 0.0
    %467 = vmatprep.subr.mxu0 0.0
    %468 = vmatpush1.msra.mxu0 0.0
    %469 = vmatprep.subr.mxu0 0.0
    %470 = vmatpush1.msra.mxu0 0.0
    %471 = vmatprep.subr.mxu0 0.0
    %472 = vmatpush1.msra.mxu0 0.0
    %473 = vmatprep.subr.mxu0 0.0
    %474 = vmatpush1.msra.mxu0 0.0
    %475 = vmatprep.subr.mxu0 0.0
    %476 = vmatpush1.msra.mxu0 0.0
    %477 = vmatprep.subr.mxu0 0.0
    %478 = vmatpush1.msra.mxu0 0.0
    %479 = vmatprep.subr.mxu0 0.0
    %480 = vmatpush1.msra.mxu0 0.0
    %481 = vmatprep.subr.mxu0 0.0
    %482 = vmatpush1.msra.mxu0 0.0
    %483 = vmatprep.subr.mxu0 0.0
    %484 = vmatpush1.msra.mxu0 0.0
    %485 = vmatprep.subr.mxu0 0.0
    %486 = vmatpush1.msra.mxu0 0.0
    %487 = vmatprep.subr.mxu0 0.0
    %488 = vmatpush1.msra.mxu0 0.0
    %489 = vmatprep.subr.mxu0 0.0
    %490 = vmatpush1.msra.mxu0 0.0
    %491 = vmatprep.subr.mxu0 0.0
    %492 = vmatpush1.msra.mxu0 0.0
    %493 = vmatprep.subr.mxu0 0.0
    %494 = vmatpush1.msra.mxu0 0.0
    %495 = vmatprep.subr.mxu0 0.0
    %496 = vmatpush1.msra.mxu0 0.0
    %497 = vmatprep.subr.mxu0 0.0
    %498 = vmatpush1.msra.mxu0 0.0
    %499 = vmatprep.subr.mxu0 0.0
    %500 = vmatpush1.msra.mxu0 0.0
    %501 = vmatprep.subr.mxu0 0.0
    %502 = vmatpush1.msra.mxu0 0.0
    %503 = vmatprep.subr.mxu0 0.0
    %504 = vmatpush1.msra.mxu0 0.0
    %505 = vmatprep.subr.mxu0 0.0
    %506 = vmatpush1.msra.mxu0 0.0
    %507 = vmatprep.subr.mxu0 0.0
    %508 = vmatpush1.msra.mxu0 0.0
    %509 = vmatprep.subr.mxu0 0.0
    %510 = vmatpush1.msra.mxu0 0.0
    %511 = vmatprep.subr.mxu0 0.0
    %512 = vmatpush1.msra.mxu0 0.0
    %513 = vmatprep.subr.mxu0 0.0
    %514 = vmatpush1.msra.mxu0 0.0
    %515 = vmatprep.mubr.f32.mxu0 0.0
    %516 = vmatmul.mubr.f32.gmra.mrb[0].mxu0 %v449
    %v517 = vpop.f32.mrb[0].mxu0
    %v518 = vadd.f32 %v443, %v517
    %v519 = vpop.f32.mrb[0].mxu0
    %520 = vdwg.mxu0
    %vm521 = vcmask 254976
    %522 = vst.msk [vmem:[#allocation8] sm:$0x3] %vm521, %v518
    // Predicated region
    $region42: #{tpu_custom_call.1} parent=1 // pred_check
      _
    $region43: #{tpu_custom_call.1} parent=1 // pred_check_branch
      %524 = sbr.rel (0) target = $region45
    $region44: #{tpu_custom_call.1} parent=1 // pred_region
      %s526 = ssub.s32 32, 32
      %527 = vsyncadd [#allocation4], %s526
      %s529 = sshll.u32 [#allocation8], 4
      %s530 = int_to_ptr.vmem [resolvable:$true] %s529
      %532 = dma.vmem_to_hbm [thread:$0]  %s530, 32, %s7, [#allocation4]
    $region45: #{tpu_custom_call.1} parent=1 // pred_fallthru
      _
    // Predicated region
    $region46: #{tpu_custom_call.1} parent=1 // pred_check
      _
    $region47: #{tpu_custom_call.1} parent=1 // pred_check_branch
      %534 = sbr.rel (0) target = $region49
    $region48: #{tpu_custom_call.1} parent=1 // pred_region
      %535 = dma.done [#allocation4], 32
    $region49: #{tpu_custom_call.1} parent=1 // pred_fallthru
      _
    %536 = vsyncpa [#allocation3], 1
    %537 = vsyncpa [#allocation6], 1
    %538 = vsyncpa [#allocation4], 1

</llo_original>
